<compile_context>
chip_gen: v7x
topology: tpu7x:2x2x1
jax: 0.10.0
libtpu: 0.0.40
codegen_flags: <defaults>
</compile_context>

<pallas_src>
import functools

import jax
import jax.numpy as jnp
from jax.experimental import pallas as pl
from jax.experimental.pallas import tpu as pltpu


# ----------------------------------------------------------------------------
# Parameter / buffer setup (glue): the sinusoidal table from __init__.
# ----------------------------------------------------------------------------
def make_positional_encoding(d_model: int, max_seq_len: int) -> jax.Array:
    position = jnp.arange(max_seq_len, dtype=jnp.float32)[:, None]          # (L, 1)
    div_term = jnp.exp(
        jnp.arange(0, d_model, 2, dtype=jnp.float32)
        * (-jnp.log(jnp.float32(10000.0)) / d_model)
    )                                                                        # (D/2,)
    pe = jnp.zeros((max_seq_len, d_model), dtype=jnp.float32)
    pe = pe.at[:, 0::2].set(jnp.sin(position * div_term))
    pe = pe.at[:, 1::2].set(jnp.cos(position * div_term))
    return pe                                                                # (L, D)


# ----------------------------------------------------------------------------
# Stateless 32-bit mixer (murmur3-style finalizer) for the dropout mask.
# ----------------------------------------------------------------------------
def _mix32(u):
    u = u ^ (u >> jnp.uint32(16))
    u = u * jnp.uint32(0x7FEB352D)
    u = u ^ (u >> jnp.uint32(15))
    u = u * jnp.uint32(0x846CA68B)
    u = u ^ (u >> jnp.uint32(16))
    return u


# ----------------------------------------------------------------------------
# Pallas kernel: out = dropout(x_tile + pe_tile, p) for one (seq-tile, batch).
# ----------------------------------------------------------------------------
def _pe_dropout_kernel(seed_ref, x_ref, pe_ref, o_ref, *,
                       p: float, apply_dropout: bool, seq_len: int, tile_s: int):
    # x_ref / pe_ref / o_ref: (tS, D) VMEM tiles (batch dim squeezed away).
    y = x_ref[...] + pe_ref[...]

    if apply_dropout:
        tS, D = y.shape
        s_idx = pl.program_id(0)          # sequence-tile index
        b_idx = pl.program_id(1)          # batch index

        row = jax.lax.broadcasted_iota(jnp.int32, (tS, D), 0).astype(jnp.uint32)
        col = jax.lax.broadcasted_iota(jnp.int32, (tS, D), 1).astype(jnp.uint32)
        abs_row = (s_idx * tile_s).astype(jnp.uint32) + row
        # Globally unique element counter (wraps mod 2^32 for huge tensors,
        # which is fine for hashing).
        elem = (b_idx.astype(jnp.uint32) * jnp.uint32(seq_len) + abs_row) \
               * jnp.uint32(D) + col
        u = _mix32(elem + seed_ref[0].astype(jnp.uint32) * jnp.uint32(2654435761))

        threshold = jnp.uint32(min(int(round(p * (2 ** 32))), 2 ** 32 - 1))
        keep = u >= threshold
        scale = jnp.asarray(1.0 / (1.0 - p), y.dtype)
        y = jnp.where(keep, y * scale, jnp.zeros_like(y))

    o_ref[...] = y.astype(o_ref.dtype)


# ----------------------------------------------------------------------------
# Tile-size selection: largest multiple-of-8 divisor of S with ~2 MiB tiles,
# so 2*(x + out + pe) buffers stay well under every generation's default
# scoped-VMEM budget (v5e 16 MiB, v6e/v7x 32 MiB).
# ----------------------------------------------------------------------------
def _choose_tile_s(S: int, D: int, itemsize: int, budget_bytes: int = 2 << 20) -> int:
    if S % 8 != 0:
        return S                                   # full-extent block required
    rows = max(8, (budget_bytes // max(D * itemsize, 1)) // 8 * 8)
    ts = min(S, int(rows))
    while S % ts != 0:                             # terminates: 8 divides S
        ts -= 8
    return max(ts, 8)


def positional_encoder(x: jax.Array,
                       pe_table: jax.Array,
                       *,
                       p: float = 0.1,
                       training: bool = True,
                       seed: int = 0) -> jax.Array:
    """Pallas equivalent of PositionalEncoder.forward.  x: (B, S, D)."""
    B, S, D = x.shape
    assert S <= pe_table.shape[0] and D == pe_table.shape[1]

    apply_dropout = bool(training) and p > 0.0
    if apply_dropout and p >= 1.0:
        # Dropout with p >= 1 zeroes everything; avoids 1/(1-p) and the
        # uint32 threshold overflow.
        return jnp.zeros_like(x)

    pe_s = pe_table[:S].astype(x.dtype)            # (S, D), static slice (glue)
    seed_arr = jnp.array([seed], dtype=jnp.int32)

    itemsize = x.dtype.itemsize
    tS = _choose_tile_s(S, D, itemsize)
    num_s = S // tS

    kernel = functools.partial(
        _pe_dropout_kernel,
        p=float(p), apply_dropout=apply_dropout, seq_len=S, tile_s=tS)

    cost = pl.CostEstimate(
        flops=B * S * D * (2 if apply_dropout else 1),
        transcendentals=0,
        bytes_accessed=2 * B * S * D * itemsize + S * D * itemsize,
    )

    # Grid: (num_s_tiles, B) — B is the inner (fastest) axis so the PE tile's
    # block index stays constant across consecutive steps (no re-DMA per batch).
    return pl.pallas_call(
        kernel,
        out_shape=jax.ShapeDtypeStruct((B, S, D), x.dtype),
        grid_spec=pltpu.PrefetchScalarGridSpec(
            num_scalar_prefetch=1,                                   # seed in SMEM
            grid=(num_s, B),
            in_specs=[
                pl.BlockSpec((pl.Squeezed(), tS, D), lambda s, b, seed: (b, s, 0)),
                pl.BlockSpec((tS, D),                lambda s, b, seed: (s, 0)),
            ],
            out_specs=pl.BlockSpec((pl.Squeezed(), tS, D), lambda s, b, seed: (b, s, 0)),
        ),
        compiler_params=pltpu.CompilerParams(
            dimension_semantics=("parallel", "parallel"),
        ),
        cost_estimate=cost,
    )(seed_arr, x, pe_s)


# ----------------------------------------------------------------------------
# Demo / self-check
# ----------------------------------------------------------------------------
if __name__ == "__main__":
    d_model = 32
    max_seq_len = 64
    B, S = 2, 8

    key = jax.random.PRNGKey(0)
    x = jax.random.normal(key, (B, S, d_model), dtype=jnp.float32)

    pe_table = make_positional_encoding(d_model, max_seq_len)
    ref_eval = x + pe_table[:S][None, :, :]

    # Eval mode (dropout is identity) — check against pure-JAX reference.
    out_eval = positional_encoder(x, pe_table, p=0.1, training=False)
    out_eval = jax.block_until_ready(out_eval)
    assert out_eval.shape == (B, S, d_model)
    assert jnp.allclose(out_eval, ref_eval, atol=1e-6, rtol=1e-6)

    # Training mode (stochastic dropout with deterministic hash-based mask).
    out_train = positional_encoder(x, pe_table, p=0.1, training=True, seed=42)
    out_train = jax.block_until_ready(out_train)
    assert out_train.shape == (B, S, d_model)
    kept = out_train != 0.0
    # Surviving elements equal ref / 0.9; dropped elements are exactly 0.
    assert jnp.allclose(
        jnp.where(kept, out_train, 0.0),
        jnp.where(kept, ref_eval / 0.9, 0.0),
        atol=1e-5, rtol=1e-5,
    )
    n_dropped = int(jnp.sum(~kept))
    assert 0 < n_dropped < out_train.size  # some, but not all, dropped

    print("KERNEL_OK")
</pallas_src>

<mosaic_0001>
module attributes {stable_mosaic.version = 11 : i64} {
  func.func @_pe_dropout_kernel(%arg0: i32, %arg1: i32, %arg2: memref<1xi32, #tpu.memory_space<smem>>, %arg3: memref<1x8x32xf32, #tpu.memory_space<vmem>>, %arg4: memref<8x32xf32, #tpu.memory_space<vmem>>, %arg5: memref<1x8x32xf32, #tpu.memory_space<vmem>>) attributes {dimension_semantics = [#tpu.dimension_semantics<parallel>, #tpu.dimension_semantics<parallel>], iteration_bounds = array<i64: 1, 2>, scalar_prefetch = 1 : i64, scratch_operands = 0 : i64, tpu.core_type = #tpu.core_type<tc>, window_params = [{transform_indices = @transform_0, window_bounds = array<i64: 1, 8, 32>}, {transform_indices = @transform_1, window_bounds = array<i64: 8, 32>}, {transform_indices = @transform_2, window_bounds = array<i64: 1, 8, 32>}]} {
    %c0 = arith.constant 0 : index
    %c0_0 = arith.constant 0 : index
    %c0_1 = arith.constant 0 : index
    %0 = vector.load %arg3[%c0, %c0_0, %c0_1] : memref<1x8x32xf32, #tpu.memory_space<vmem>>, vector<1x8x32xf32>
    %1 = vector.shape_cast %0 : vector<1x8x32xf32> to vector<8x32xf32>
    %c0_2 = arith.constant 0 : index
    %c0_3 = arith.constant 0 : index
    %2 = vector.load %arg4[%c0_2, %c0_3] : memref<8x32xf32, #tpu.memory_space<vmem>>, vector<8x32xf32>
    %3 = arith.addf %1, %2 : vector<8x32xf32>
    %c0_4 = arith.constant 0 : index
    %c0_5 = arith.constant 0 : index
    %c0_6 = arith.constant 0 : index
    %4 = vector.load %arg5[%c0_4, %c0_5, %c0_6] : memref<1x8x32xf32, #tpu.memory_space<vmem>>, vector<1x8x32xf32>
    %5 = vector.shape_cast %4 : vector<1x8x32xf32> to vector<8x32xf32>
    %6 = vector.shape_cast %3 : vector<8x32xf32> to vector<1x8x32xf32>
    tpu.vector_store %arg5[%c0_4, %c0_5, %c0_6], %6 {strides = array<i32>} : memref<1x8x32xf32, #tpu.memory_space<vmem>>, vector<1x8x32xf32>,
    return
  }
  func.func @transform_0(%arg0: i32, %arg1: i32, %arg2: memref<1xi32, #tpu.memory_space<smem>>) -> (i32, i32, i32) {
    %c0_i32 = arith.constant 0 : i32
    %c0_i32_0 = arith.constant 0 : i32
    return %arg1, %arg0, %c0_i32 : i32, i32, i32
  }
  func.func @transform_1(%arg0: i32, %arg1: i32, %arg2: memref<1xi32, #tpu.memory_space<smem>>) -> (i32, i32) {
    %c0_i32 = arith.constant 0 : i32
    %c0_i32_0 = arith.constant 0 : i32
    return %arg0, %c0_i32 : i32, i32
  }
  func.func @transform_2(%arg0: i32, %arg1: i32, %arg2: memref<1xi32, #tpu.memory_space<smem>>) -> (i32, i32, i32) {
    %c0_i32 = arith.constant 0 : i32
    %c0_i32_0 = arith.constant 0 : i32
    return %arg1, %arg0, %c0_i32 : i32, i32, i32
  }
}

</mosaic_0001>

<llo_original>
// kernel: tpu_custom_call.1
$region0: #{tpu_custom_call.1}
  #allocation0 [shape = 'u32[]', space=smem, size = 0x4, offset = 0x4, fixed_abs, tag = 'smem constant byte address 0x4 - core index']
  #allocation1 [shape = 'u32[144,128]{1,0:T(1,128)}', space=vmem, size = 0x12000, scoped, tag = 'internal scratch']
  #allocation2 [shape = 's32[1]{0}', space=sflag, size = 0x4, scoped, tag = 'scoped memory for tpu_custom_call.1']
  #allocation3 [shape = 's32[1]{0:T(128)S(6)}', space=smem, size = 0x200, scoped, tag = 'prefetched SMEM operand 0']
  %s0 = inlined_call_operand.<no memory space> [shape: s32[1], index: 0, kind: input, shape index: {}]
  %s1 = inlined_call_operand.hbm [shape: f32[2,8,32], index: 1, kind: input, shape index: {}]
  %s2 = inlined_call_operand.hbm [shape: f32[8,32], index: 2, kind: input, shape index: {}]
  %s3 = inlined_call_operand.hbm [shape: f32[2,8,32], index: 3, kind: output, shape index: {}]
  %s4 = sld [smem:[#allocation0]]
  $region49: #{tpu_custom_call.1} parent=0
    _
  %s6 = ssub.s32 1, %s4
  %s7 = scalar_select 0, %s6, %s4
  %8 = sst [smem:[#allocation3]] %s0
  $region1: #{tpu_custom_call.1} parent=0
    #allocation4 [shape = 'u8[8192]{0}', space=vmem, size = 0x2000, scoped, tag = 'input window, operand 1']
    #allocation5 [shape = 's32[2]{0}', space=sflag, size = 0x8, scoped, tag = 'scoped memory for tpu_custom_call.1']
    #allocation6 [shape = 's32[2]{0}', space=sflag, size = 0x8, scoped, tag = 'scoped memory for tpu_custom_call.1']
    #allocation7 [shape = 'u8[4096]{0}', space=vmem, size = 0x1000, scoped, tag = 'input window, operand 2, single buffered']
    #allocation8 [shape = 's32[1]{0}', space=sflag, size = 0x4, scoped, tag = 'scoped memory for tpu_custom_call.1']
    #allocation9 [shape = 'u8[8192]{0}', space=vmem, size = 0x2000, scoped, tag = 'output window, operand 0']
    %9 = vsyncpa [#allocation5], 0
    %s10 = scalar_lea.sflag [#allocation5], 1
    %11 = vsyncpa %s10, 0
    %12 = vsyncpa [#allocation8], 0
    %13 = vsyncpa [#allocation6], 0
    %s14 = scalar_lea.sflag [#allocation6], 1
    %15 = vsyncpa %s14, 0
    loop: start=0, step=1, limit=4
    $region2: #{tpu_custom_call.1} parent=1 // loop_pre_header
      _
    $region3: #{tpu_custom_call.1} parent=1 // loop_header
      %s17 = sphi 0, %s21
      %p18 = scmp.ge.s32.totalorder %s17, 4
      %s24 = sphi 0, %s36
      %s25 = sphi 0, %s32
      %s26 = sphi 0, %s24
      %s27 = sphi 0, %s25
      %s28 = sphi 0, %s26
      %s29 = sphi 0, %s27
      %s41 = sphi 0, %s43
      %s44 = sphi 0, %s41
      %s45 = sphi 0, %s44
      %s61 = sphi 0, %s45
      %s67 = sphi 0, %s69
      %s70 = sphi 0, %s67
      %s71 = sphi 0, %s70
      %s87 = sphi 0, %s71
      %s95 = sphi 0, %s97
      %s98 = sphi 0, %s95
      %s99 = sphi 0, %s98
      %s115 = sphi 0, %s99
    $region4: #{tpu_custom_call.1} parent=1 // loop_header_branch
      %20 = sbr.rel (%p18) target = $region8
    $region5: #{tpu_custom_call.1} parent=1 // loop_body
      %s22 = ssub.s32 %s17, 1
      %s23 = ssub.s32 %s17, 2
      %s30 = sadd.s32 1, %s25
      %p31 = scmp.ge.s32.totalorder %s30, 2
      %s32 = scalar_select %p31, 0, %s30
      %s33 = sadd.s32 1, %s24
      %s34 = scalar_select %p31, %s33, %s24
      %p35 = scmp.ge.s32.totalorder %s34, 1
      %s36 = scalar_select %p35, 0, %s34
      %s37 = ssub.s32 %s25, %s32
      %s38 = ssub.s32 %s24, %s36
      %s39 = sor.u32 %s37, %s38
      %p40 = scmp.eq.s32.totalorder %s39, 0
      %s42 = sadd.s32 %s41, 1
      %s43 = scalar_select %p40, %s41, %s42
      %p46 = pneg %p40
      %p47 = scmp.eq.s32.totalorder %s17, 1
      %p48 = por %p46, %p47
      %p49 = scmp.ne.s32.totalorder %s41, %s44
      %p50 = scmp.eq.s32.totalorder %s17, 0
      %p51 = por %p49, %p50
      %p52 = scmp.ne.s32.totalorder %s41, %s44
      %p53 = scmp.eq.s32.totalorder %s22, 1
      %p54 = por %p52, %p53
      %p55 = scmp.ne.s32.totalorder %s44, %s45
      %p56 = scmp.eq.s32.totalorder %s22, 0
      %p57 = por %p55, %p56
      %p58 = scmp.ne.s32.totalorder %s44, %s45
      %p59 = scmp.eq.s32.totalorder %s23, 1
      %p60 = por %p58, %p59
      %p62 = scmp.ne.s32.totalorder %s45, %s61
      %p63 = scmp.eq.s32.totalorder %s23, 0
      %p64 = por %p62, %p63
      %s65 = ssub.s32 %s24, %s36
      %p66 = scmp.eq.s32.totalorder %s65, 0
      %s68 = sadd.s32 %s67, 1
      %s69 = scalar_select %p66, %s67, %s68
      %p72 = pneg %p66
      %p73 = scmp.eq.s32.totalorder %s17, 1
      %p74 = por %p72, %p73
      %p75 = scmp.ne.s32.totalorder %s67, %s70
      %p76 = scmp.eq.s32.totalorder %s17, 0
      %p77 = por %p75, %p76
      %p78 = scmp.ne.s32.totalorder %s67, %s70
      %p79 = scmp.eq.s32.totalorder %s22, 1
      %p80 = por %p78, %p79
      %p81 = scmp.ne.s32.totalorder %s70, %s71
      %p82 = scmp.eq.s32.totalorder %s22, 0
      %p83 = por %p81, %p82
      %p84 = scmp.ne.s32.totalorder %s70, %s71
      %p85 = scmp.eq.s32.totalorder %s23, 1
      %p86 = por %p84, %p85
      %p88 = scmp.ne.s32.totalorder %s71, %s87
      %p89 = scmp.eq.s32.totalorder %s23, 0
      %p90 = por %p88, %p89
      %s91 = ssub.s32 %s25, %s32
      %s92 = ssub.s32 %s24, %s36
      %s93 = sor.u32 %s91, %s92
      %p94 = scmp.eq.s32.totalorder %s93, 0
      %s96 = sadd.s32 %s95, 1
      %s97 = scalar_select %p94, %s95, %s96
      %p100 = pneg %p94
      %p101 = scmp.eq.s32.totalorder %s17, 1
      %p102 = por %p100, %p101
      %p103 = scmp.ne.s32.totalorder %s95, %s98
      %p104 = scmp.eq.s32.totalorder %s17, 0
      %p105 = por %p103, %p104
      %p106 = scmp.ne.s32.totalorder %s95, %s98
      %p107 = scmp.eq.s32.totalorder %s22, 1
      %p108 = por %p106, %p107
      %p109 = scmp.ne.s32.totalorder %s98, %s99
      %p110 = scmp.eq.s32.totalorder %s22, 0
      %p111 = por %p109, %p110
      %p112 = scmp.ne.s32.totalorder %s98, %s99
      %p113 = scmp.eq.s32.totalorder %s23, 1
      %p114 = por %p112, %p113
      %p116 = scmp.ne.s32.totalorder %s99, %s115
      %p117 = scmp.eq.s32.totalorder %s23, 0
      %p118 = por %p116, %p117
      %p119 = scmp.le.s32.totalorder 1, %s17
      %p120 = scmp.lt.s32.totalorder %s17, 3
      %p121 = pnand %p119, %p120
      %p122 = pneg %p121
      // Predicated region
      $region9: #{tpu_custom_call.1} parent=5 // pred_check
        _
      $region10: #{tpu_custom_call.1} parent=5 // pred_check_branch
        %124 = sbr.rel (%p121) target = $region12
      $region11: #{tpu_custom_call.1} parent=5 // pred_region
        %s125 = ssub.s32 %s17, 1
        // Predicated region
        $region13: #{tpu_custom_call.1} parent=11 // pred_check
          %p126 = pneg %p83
        $region14: #{tpu_custom_call.1} parent=11 // pred_check_branch
          %128 = sbr.rel (%p126) target = $region16
        $region15: #{tpu_custom_call.1} parent=11 // pred_region
          %s130 = ssub.s32 128, 128
          %131 = vsyncadd [#allocation8], %s130
          %s132 = smul.addr %s26, 128
          %s133 = scalar_lea.hbm %s2, %s132
          %s135 = sshll.u32 [#allocation7], 4
          %s136 = int_to_ptr.vmem [resolvable:$true] %s135
          %138 = dma.hbm_to_vmem [thread:$0]  %s133, 128, %s136, [#allocation8]
        $region16: #{tpu_custom_call.1} parent=11 // pred_fallthru
          _
      $region12: #{tpu_custom_call.1} parent=5 // pred_fallthru
        _
      %p139 = scmp.lt.s32.totalorder %s17, 2
      // Predicated region
      $region17: #{tpu_custom_call.1} parent=5 // pred_check
        %p140 = pneg %p139
      $region18: #{tpu_custom_call.1} parent=5 // pred_check_branch
        %142 = sbr.rel (%p140) target = $region20
      $region19: #{tpu_custom_call.1} parent=5 // pred_region
        // Predicated region
        $region21: #{tpu_custom_call.1} parent=19 // pred_check
          %p143 = pneg %p51
        $region22: #{tpu_custom_call.1} parent=19 // pred_check_branch
          %145 = sbr.rel (%p143) target = $region24
        $region23: #{tpu_custom_call.1} parent=19 // pred_region
          %s146 = sand.u32 %s41, 1
          %s147 = scalar_lea.sflag [#allocation5], %s146
          %s148 = sand.u32 %s41, 1
          %s149 = smul.addr %s148, 8
          %s150 = scalar_lea.vmem [#allocation4], %s149
          %s152 = ssub.s32 128, 128
          %153 = vsyncadd %s147, %s152
          %s154 = sadd.s32 %s24, %s25
          %s155 = smul.addr %s154, 128
          %s156 = scalar_lea.hbm %s1, %s155
          %s158 = sshll.u32 %s150, 4
          %s159 = int_to_ptr.vmem [resolvable:$true] %s158
          %161 = dma.hbm_to_vmem [thread:$0]  %s156, 128, %s159, %s147
        $region24: #{tpu_custom_call.1} parent=19 // pred_fallthru
          _
      $region20: #{tpu_custom_call.1} parent=5 // pred_fallthru
        _
      %p162 = scmp.le.s32.totalorder 1, %s17
      %p163 = scmp.lt.s32.totalorder %s17, 3
      %p164 = pnand %p162, %p163
      %p165 = pneg %p164
      // Predicated region
      $region25: #{tpu_custom_call.1} parent=5 // pred_check
        _
      $region26: #{tpu_custom_call.1} parent=5 // pred_check_branch
        %167 = sbr.rel (%p164) target = $region28
      $region27: #{tpu_custom_call.1} parent=5 // pred_region
        %s168 = ssub.s32 %s17, 1
        %s169 = sand.u32 %s44, 1
        %s170 = scalar_lea.sflag [#allocation5], %s169
        %s171 = sand.u32 %s44, 1
        %s172 = smul.addr %s171, 8
        %s173 = scalar_lea.vmem [#allocation4], %s172
        // Predicated region
        $region29: #{tpu_custom_call.1} parent=27 // pred_check
          %p174 = pneg %p57
        $region30: #{tpu_custom_call.1} parent=27 // pred_check_branch
          %176 = sbr.rel (%p174) target = $region32
        $region31: #{tpu_custom_call.1} parent=27 // pred_region
          %177 = dma.done %s170, 128
        $region32: #{tpu_custom_call.1} parent=27 // pred_fallthru
          _
        // Predicated region
        $region33: #{tpu_custom_call.1} parent=27 // pred_check
          %p178 = pneg %p83
        $region34: #{tpu_custom_call.1} parent=27 // pred_check_branch
          %180 = sbr.rel (%p178) target = $region36
        $region35: #{tpu_custom_call.1} parent=27 // pred_region
          %181 = dma.done [#allocation8], 128
        $region36: #{tpu_custom_call.1} parent=27 // pred_fallthru
          _
        %s182 = sand.u32 %s44, 1
        %s183 = scalar_lea.sflag [#allocation5], %s182
        %s184 = sand.u32 %s44, 1
        %s185 = smul.addr %s184, 8
        %s186 = scalar_lea.vmem [#allocation4], %s185
        %p187 = pneg %p57
        %p188 = pneg %p54
        %p189 = pneg %p83
        %p190 = pneg %p80
        %p191 = pneg %p111
        %p192 = pneg %p108
        %s193 = sand.u32 %s98, 1
        %s194 = scalar_lea.sflag [#allocation6], %s193
        %s195 = sand.u32 %s98, 1
        %s196 = smul.addr %s195, 8
        %s197 = scalar_lea.vmem [#allocation9], %s196
        %v198 = vld [vmem:[%s173] sm:$0xff]
        %v199 = vld [vmem:[#allocation7] sm:$0xff]
        %v200 = vadd.f32 %v198, %v199
        %vm201 = vcmask 261120
        %202 = vst.msk [vmem:[%s197] sm:$0xff] %vm201, %v200
        %s203 = sand.u32 %s98, 1
        %s204 = scalar_lea.sflag [#allocation6], %s203
        %s205 = sand.u32 %s98, 1
        %s206 = smul.addr %s205, 8
        %s207 = scalar_lea.vmem [#allocation9], %s206
        // Predicated region
        $region37: #{tpu_custom_call.1} parent=27 // pred_check
          %p208 = pneg %p108
        $region38: #{tpu_custom_call.1} parent=27 // pred_check_branch
          %210 = sbr.rel (%p208) target = $region40
        $region39: #{tpu_custom_call.1} parent=27 // pred_region
          %s212 = ssub.s32 128, 128
          %213 = vsyncadd %s204, %s212
          %s214 = sadd.s32 %s26, %s27
          %s215 = smul.addr %s214, 128
          %s216 = scalar_lea.hbm %s3, %s215
          %s218 = sshll.u32 %s207, 4
          %s219 = int_to_ptr.vmem [resolvable:$true] %s218
          %221 = dma.vmem_to_hbm [thread:$0]  %s219, 128, %s216, %s204
        $region40: #{tpu_custom_call.1} parent=27 // pred_fallthru
          _
      $region28: #{tpu_custom_call.1} parent=5 // pred_fallthru
        _
      %p222 = scmp.le.s32.totalorder 2, %s17
      // Predicated region
      $region41: #{tpu_custom_call.1} parent=5 // pred_check
        %p223 = pneg %p222
      $region42: #{tpu_custom_call.1} parent=5 // pred_check_branch
        %225 = sbr.rel (%p223) target = $region44
      $region43: #{tpu_custom_call.1} parent=5 // pred_region
        %s226 = ssub.s32 %s17, 2
        // Predicated region
        $region45: #{tpu_custom_call.1} parent=43 // pred_check
          %p227 = pneg %p114
        $region46: #{tpu_custom_call.1} parent=43 // pred_check_branch
          %229 = sbr.rel (%p227) target = $region48
        $region47: #{tpu_custom_call.1} parent=43 // pred_region
          %s230 = sand.u32 %s99, 1
          %s231 = scalar_lea.sflag [#allocation6], %s230
          %s232 = sand.u32 %s99, 1
          %s233 = smul.addr %s232, 8
          %s234 = scalar_lea.vmem [#allocation9], %s233
          %235 = dma.done %s231, 128
        $region48: #{tpu_custom_call.1} parent=43 // pred_fallthru
          _
      $region44: #{tpu_custom_call.1} parent=5 // pred_fallthru
        _
    $region6: #{tpu_custom_call.1} parent=1 // loop_footer
      %s21 = sadd.s32 1, %s17
    $region7: #{tpu_custom_call.1} parent=1 // loop_footer_branch
      %16 = sbr.rel target = $region3
    $region8: #{tpu_custom_call.1} parent=1 // loop_exit
      _
    %236 = vsyncpa [#allocation5], 1
    %s237 = scalar_lea.sflag [#allocation5], 1
    %238 = vsyncpa %s237, 1
    %239 = vsyncpa [#allocation8], 1
    %240 = vsyncpa [#allocation6], 1
    %s241 = scalar_lea.sflag [#allocation6], 1
    %242 = vsyncpa %s241, 1

</llo_original>
